<compile_context>
chip_gen: v5e
topology: v5e:2x2
jax: 0.10.0
libtpu: 0.0.40
codegen_flags: <defaults>
</compile_context>

<pallas_src>
import math
from functools import partial

import jax
import jax.numpy as jnp
from jax.experimental import pallas as pl
from jax.experimental.pallas import tpu as pltpu


def _rot_lanes(a, offset):
    """Circular lane rotation by a static positive `offset` source lanes."""
    T = a.shape[-1]
    return pltpu.roll(a, (T - offset) % T, a.ndim - 1)


def _lane_window_sum(x, length):
    """Sum of `length` consecutive lanes (circular), O(log2(length)) rolls.

    The window is anchored at one end of each run of `length` lanes; which end
    depends on the hardware roll convention, so the caller resolves the anchor
    with a tiny runtime probe (see _dice_kernel).
    """
    if length <= 1:
        return x
    pow_win, pw_len = x, 1      # windowed sum of length pw_len (power of two)
    res, res_len = None, 0      # windowed sum of the binary bits consumed so far
    rem = length
    while rem:
        if rem & 1:
            if res is None:
                res, res_len = pow_win, pw_len
            else:
                res = res + _rot_lanes(pow_win, res_len)
                res_len += pw_len
        rem >>= 1
        if rem:
            pow_win = pow_win + _rot_lanes(pow_win, pw_len)
            pw_len *= 2
    return res


def _dice_kernel(x_ref, t_ref, o_ref, *, smooth):
    # x_ref: (C, T) logits tile (one batch element, T spatial positions)
    # t_ref: (C, T) target tile (any float dtype)
    # o_ref: (8, 128) f32 per-batch partial-sum accumulator (value in [0, 0])
    h = pl.program_id(1)

    @pl.when(h == 0)
    def _():
        o_ref[...] = jnp.zeros_like(o_ref)

    x = x_ref[...].astype(jnp.float32)
    t = t_ref[...].astype(jnp.float32)
    C, T = x.shape

    # Channel softmax (sublane axis): one reciprocal per column, then multiplies.
    m = jnp.max(x, axis=0, keepdims=True)
    e = jnp.exp(x - m)
    p = e * pl.reciprocal(jnp.sum(e, axis=0, keepdims=True))

    # Segmented (period-C) lane sums -> per-row intersection / denominator.
    cs_inter = _lane_window_sum(p * t, C)
    cs_denom = _lane_window_sum(p + t, C)
    dice = (2.0 * cs_inter + smooth) / (cs_denom + smooth)

    # The full chunk sum sits at one end of each C-lane chunk; a 1-lane probe
    # resolves which end the hardware roll convention anchors it to.
    lane1 = jax.lax.broadcasted_iota(jnp.int32, (1, T), 1)
    probe_r = _rot_lanes(lane1.astype(jnp.float32), 1)
    at0 = jnp.sum(jnp.where(lane1 == 0, probe_r, 0.0))
    anchor = jnp.where(at0 < 1.5, 0, C - 1)

    lane = jax.lax.broadcasted_iota(jnp.int32, (C, T), 1)
    partial_sum = jnp.sum(jnp.where(lane % C == anchor, dice, 0.0))

    row = jax.lax.broadcasted_iota(jnp.int32, o_ref.shape, 0)
    col = jax.lax.broadcasted_iota(jnp.int32, o_ref.shape, 1)
    o_ref[...] += jnp.where((row == 0) & (col == 0), partial_sum, 0.0)


def _pick_hw_tile(hw, c, target_bytes=1 << 20):
    """Lane-tile of H*W: divides hw, multiple of C, multiple of 128 (or == hw)."""
    base = (c * 128) // math.gcd(c, 128)          # lcm(C, 128)
    if hw % base != 0 or hw <= base:
        return hw                                  # single full-width tile
    m = hw // base
    target_mult = max(1, target_bytes // (4 * c * base))
    best = 1
    for d in range(1, min(m, target_mult) + 1):
        if m % d == 0:
            best = d
    return base * best


def dice_loss(inp, target, smooth=1.0):
    """1 - soft_dice_coeff(inp, target, smooth); inp/target are NCHW."""
    N, C, H, W = inp.shape
    HW = H * W
    # The chunk-of-C structure of .view(-1, C) stays within one channel plane
    # iff H*W is divisible by C (same restriction as the PyTorch trick relies on).
    assert HW % C == 0, "kernel assumes H*W divisible by num_classes"
    T = _pick_hw_tile(HW, C)

    x = inp.reshape(N, C, HW)          # keep native dtypes; cast in-kernel
    t = target.reshape(N, C, HW)

    partials = pl.pallas_call(
        partial(_dice_kernel, smooth=float(smooth)),
        out_shape=jax.ShapeDtypeStruct((N, 8, 128), jnp.float32),
        grid=(N, HW // T),
        in_specs=[
            pl.BlockSpec((None, C, T), lambda n, h: (n, 0, h)),
            pl.BlockSpec((None, C, T), lambda n, h: (n, 0, h)),
        ],
        out_specs=pl.BlockSpec((None, 8, 128), lambda n, h: (n, 0, 0)),
        compiler_params=pltpu.CompilerParams(
            dimension_semantics=("parallel", "arbitrary")),
    )(x, t)

    n_rows = N * HW                    # number of rows in the (-1, C) view
    return 1.0 - jnp.sum(partials) / n_rows


def dice_loss_ref(inp, target, smooth=1.0):
    """Pure-JAX reference matching the PyTorch module exactly."""
    C = inp.shape[1]
    p = jax.nn.softmax(inp.astype(jnp.float32), axis=1).reshape(-1, C)
    t = target.astype(jnp.float32).reshape(-1, C)
    inter = jnp.sum(p * t, axis=1)
    denom = jnp.sum(p, axis=1) + jnp.sum(t, axis=1)
    dice = (2.0 * inter + smooth) / (denom + smooth)
    return 1.0 - jnp.mean(dice)


if __name__ == "__main__":
    key = jax.random.PRNGKey(0)
    k1, k2 = jax.random.split(key)
    N, C, H, W = 2, 4, 16, 16
    inp = jax.random.normal(k1, (N, C, H, W), dtype=jnp.float32)
    labels = jax.random.randint(k2, (N, H, W), 0, C)
    # one-hot target in bf16 (exact for 0/1) -> ~25% less HBM traffic in-kernel
    target = jax.nn.one_hot(labels, C, dtype=jnp.bfloat16).transpose(0, 3, 1, 2)

    loss = jax.block_until_ready(dice_loss(inp, target, smooth=1.0))
    ref = jax.block_until_ready(dice_loss_ref(inp, target, smooth=1.0))

    assert jnp.allclose(loss, ref, atol=1e-5, rtol=1e-5), (loss, ref)
    print("KERNEL_OK")
</pallas_src>

<mosaic_0001>
module attributes {stable_mosaic.version = 11 : i64} {
  func.func @_dice_kernel(%arg0: i32, %arg1: i32, %arg2: memref<1x4x256xf32, #tpu.memory_space<vmem>>, %arg3: memref<1x4x256xbf16, #tpu.memory_space<vmem>>, %arg4: memref<1x8x128xf32, #tpu.memory_space<vmem>>) attributes {dimension_semantics = [#tpu.dimension_semantics<parallel>, #tpu.dimension_semantics<arbitrary>], iteration_bounds = array<i64: 2, 1>, scalar_prefetch = 0 : i64, scratch_operands = 0 : i64, tpu.core_type = #tpu.core_type<tc>, window_params = [{transform_indices = @transform_0, window_bounds = array<i64: 1, 4, 256>}, {transform_indices = @transform_1, window_bounds = array<i64: 1, 4, 256>}, {transform_indices = @transform_2, window_bounds = array<i64: 1, 8, 128>}]} {
    %c0_i32 = arith.constant 0 : i32
    %0 = arith.cmpi eq, %arg1, %c0_i32 : i32
    %1 = arith.extui %0 : i1 to i32
    %c0_i32_0 = arith.constant 0 : i32
    %2 = arith.cmpi ne, %1, %c0_i32_0 : i32
    scf.if %2 {
      %cst_33 = arith.constant 0.000000e+00 : f32
      %89 = vector.broadcast %cst_33 : f32 to vector<8x128xf32>
      %c0_34 = arith.constant 0 : index
      %c0_35 = arith.constant 0 : index
      %c0_36 = arith.constant 0 : index
      %90 = vector.load %arg4[%c0_34, %c0_35, %c0_36] : memref<1x8x128xf32, #tpu.memory_space<vmem>>, vector<1x8x128xf32>
      %91 = vector.shape_cast %90 : vector<1x8x128xf32> to vector<8x128xf32>
      %92 = vector.shape_cast %89 : vector<8x128xf32> to vector<1x8x128xf32>
      tpu.vector_store %arg4[%c0_34, %c0_35, %c0_36], %92 {strides = array<i32>} : memref<1x8x128xf32, #tpu.memory_space<vmem>>, vector<1x8x128xf32>,
    } else {
    }
    %c0 = arith.constant 0 : index
    %c0_1 = arith.constant 0 : index
    %c0_2 = arith.constant 0 : index
    %3 = vector.load %arg2[%c0, %c0_1, %c0_2] : memref<1x4x256xf32, #tpu.memory_space<vmem>>, vector<1x4x256xf32>
    %4 = vector.shape_cast %3 : vector<1x4x256xf32> to vector<4x256xf32>
    %c0_3 = arith.constant 0 : index
    %c0_4 = arith.constant 0 : index
    %c0_5 = arith.constant 0 : index
    %5 = vector.load %arg3[%c0_3, %c0_4, %c0_5] : memref<1x4x256xbf16, #tpu.memory_space<vmem>>, vector<1x4x256xbf16>
    %6 = vector.shape_cast %5 : vector<1x4x256xbf16> to vector<4x256xbf16>
    %7 = arith.extf %6 : vector<4x256xbf16> to vector<4x256xf32>
    %cst = arith.constant dense<0xFF800000> : vector<256xf32>
    %8 = vector.multi_reduction <maximumf>, %4, %cst [0] : vector<4x256xf32> to vector<256xf32>
    %9 = vector.shape_cast %8 : vector<256xf32> to vector<1x256xf32>
    %10 = vector.broadcast %9 : vector<1x256xf32> to vector<4x256xf32>
    %11 = arith.subf %4, %10 : vector<4x256xf32>
    %12 = math.exp %11 : vector<4x256xf32>
    %cst_6 = arith.constant dense<0.000000e+00> : vector<256xf32>
    %13 = vector.multi_reduction <add>, %12, %cst_6 [0] : vector<4x256xf32> to vector<256xf32>
    %14 = vector.shape_cast %13 : vector<256xf32> to vector<1x256xf32>
    %15 = tpu.reciprocal %14 : vector<1x256xf32> -> vector<1x256xf32>
    %16 = vector.broadcast %15 : vector<1x256xf32> to vector<4x256xf32>
    %17 = arith.mulf %12, %16 : vector<4x256xf32>
    %18 = arith.mulf %17, %7 : vector<4x256xf32>
    %c255_i32 = arith.constant 255 : i32
    %19 = tpu.dynamic_rotate %18 by %c255_i32 dim 1 : vector<4x256xf32>, i32 -> vector<4x256xf32>
    %20 = arith.addf %18, %19 : vector<4x256xf32>
    %c254_i32 = arith.constant 254 : i32
    %21 = tpu.dynamic_rotate %20 by %c254_i32 dim 1 : vector<4x256xf32>, i32 -> vector<4x256xf32>
    %22 = arith.addf %20, %21 : vector<4x256xf32>
    %23 = arith.addf %17, %7 : vector<4x256xf32>
    %c255_i32_7 = arith.constant 255 : i32
    %24 = tpu.dynamic_rotate %23 by %c255_i32_7 dim 1 : vector<4x256xf32>, i32 -> vector<4x256xf32>
    %25 = arith.addf %23, %24 : vector<4x256xf32>
    %c254_i32_8 = arith.constant 254 : i32
    %26 = tpu.dynamic_rotate %25 by %c254_i32_8 dim 1 : vector<4x256xf32>, i32 -> vector<4x256xf32>
    %27 = arith.addf %25, %26 : vector<4x256xf32>
    %cst_9 = arith.constant 2.000000e+00 : f32
    %28 = vector.broadcast %cst_9 : f32 to vector<4x256xf32>
    %29 = arith.mulf %28, %22 : vector<4x256xf32>
    %cst_10 = arith.constant 1.000000e+00 : f32
    %30 = vector.broadcast %cst_10 : f32 to vector<4x256xf32>
    %31 = arith.addf %29, %30 : vector<4x256xf32>
    %cst_11 = arith.constant 1.000000e+00 : f32
    %32 = vector.broadcast %cst_11 : f32 to vector<4x256xf32>
    %33 = arith.addf %27, %32 : vector<4x256xf32>
    %34 = arith.divf %31, %33 : vector<4x256xf32>
    %35 = tpu.iota {dimensions = array<i32: 1>} : vector<1x256xi32>
    %36 = arith.sitofp %35 : vector<1x256xi32> to vector<1x256xf32>
    %c255_i32_12 = arith.constant 255 : i32
    %37 = tpu.dynamic_rotate %36 by %c255_i32_12 dim 1 : vector<1x256xf32>, i32 -> vector<1x256xf32>
    %c0_i32_13 = arith.constant 0 : i32
    %38 = vector.broadcast %c0_i32_13 : i32 to vector<1x256xi32>
    %39 = arith.cmpi eq, %35, %38 : vector<1x256xi32>
    %cst_14 = arith.constant 0.000000e+00 : f32
    %40 = vector.broadcast %cst_14 : f32 to vector<1x256xf32>
    %41 = arith.select %39, %37, %40 : vector<1x256xi1>, vector<1x256xf32>
    %42 = vector.shape_cast %41 : vector<1x256xf32> to vector<1x1x256xf32>
    %cst_15 = arith.constant dense<0.000000e+00> : vector<1xf32>
    %43 = vector.multi_reduction <add>, %42, %cst_15 [1, 2] : vector<1x1x256xf32> to vector<1xf32>
    %44 = vector.shape_cast %43 : vector<1xf32> to vector<1x1x1xf32>
    %45 = vector.extract %44[0, 0, 0] : f32 from vector<1x1x1xf32>
    %cst_16 = arith.constant 1.500000e+00 : f32
    %46 = arith.cmpf olt, %45, %cst_16 : f32
    %c0_i32_17 = arith.constant 0 : i32
    %c3_i32 = arith.constant 3 : i32
    %47 = arith.select %46, %c0_i32_17, %c3_i32 : i32
    %48 = tpu.iota {dimensions = array<i32: 1>} : vector<4x256xi32>
    %c4_i32 = arith.constant 4 : i32
    %c0_i32_18 = arith.constant 0 : i32
    %49 = arith.cmpi eq, %c4_i32, %c0_i32_18 : i32
    %c1_i32 = arith.constant 1 : i32
    %50 = arith.select %49, %c1_i32, %c4_i32 : i32
    %51 = vector.broadcast %50 : i32 to vector<4x256xi32>
    %52 = arith.remsi %48, %51 : vector<4x256xi32>
    %c0_i32_19 = arith.constant 0 : i32
    %53 = vector.broadcast %c0_i32_19 : i32 to vector<4x256xi32>
    %54 = arith.cmpi ne, %52, %53 : vector<4x256xi32>
    %c0_i32_20 = arith.constant 0 : i32
    %55 = vector.broadcast %c0_i32_20 : i32 to vector<4x256xi32>
    %56 = arith.cmpi slt, %52, %55 : vector<4x256xi32>
    %c0_i32_21 = arith.constant 0 : i32
    %57 = arith.cmpi slt, %50, %c0_i32_21 : i32
    %58 = vector.broadcast %57 : i1 to vector<4x256xi1>
    %59 = vector.broadcast %58 : vector<4x256xi1> to vector<4x256xi1>
    %60 = arith.xori %56, %59 : vector<4x256xi1>
    %61 = arith.andi %60, %54 : vector<4x256xi1>
    %62 = vector.broadcast %50 : i32 to vector<4x256xi32>
    %63 = arith.addi %52, %62 : vector<4x256xi32>
    %64 = arith.select %61, %63, %52 : vector<4x256xi1>, vector<4x256xi32>
    %65 = vector.broadcast %47 : i32 to vector<4x256xi32>
    %66 = arith.cmpi eq, %64, %65 : vector<4x256xi32>
    %cst_22 = arith.constant 0.000000e+00 : f32
    %67 = vector.broadcast %cst_22 : f32 to vector<4x256xf32>
    %68 = arith.select %66, %34, %67 : vector<4x256xi1>, vector<4x256xf32>
    %69 = vector.shape_cast %68 : vector<4x256xf32> to vector<1x4x256xf32>
    %cst_23 = arith.constant dense<0.000000e+00> : vector<1xf32>
    %70 = vector.multi_reduction <add>, %69, %cst_23 [1, 2] : vector<1x4x256xf32> to vector<1xf32>
    %71 = vector.shape_cast %70 : vector<1xf32> to vector<1x1x1xf32>
    %72 = vector.extract %71[0, 0, 0] : f32 from vector<1x1x1xf32>
    %73 = tpu.iota {dimensions = array<i32: 0>} : vector<8x128xi32>
    %74 = tpu.iota {dimensions = array<i32: 1>} : vector<8x128xi32>
    %c0_24 = arith.constant 0 : index
    %c0_25 = arith.constant 0 : index
    %c0_26 = arith.constant 0 : index
    %75 = vector.load %arg4[%c0_24, %c0_25, %c0_26] : memref<1x8x128xf32, #tpu.memory_space<vmem>>, vector<1x8x128xf32>
    %76 = vector.shape_cast %75 : vector<1x8x128xf32> to vector<8x128xf32>
    %c0_i32_27 = arith.constant 0 : i32
    %77 = vector.broadcast %c0_i32_27 : i32 to vector<8x128xi32>
    %78 = arith.cmpi eq, %73, %77 : vector<8x128xi32>
    %c0_i32_28 = arith.constant 0 : i32
    %79 = vector.broadcast %c0_i32_28 : i32 to vector<8x128xi32>
    %80 = arith.cmpi eq, %74, %79 : vector<8x128xi32>
    %81 = arith.andi %78, %80 : vector<8x128xi1>
    %cst_29 = arith.constant 0.000000e+00 : f32
    %82 = vector.broadcast %72 : f32 to vector<8x128xf32>
    %83 = vector.broadcast %cst_29 : f32 to vector<8x128xf32>
    %84 = arith.select %81, %82, %83 : vector<8x128xi1>, vector<8x128xf32>
    %85 = arith.addf %76, %84 : vector<8x128xf32>
    %c0_30 = arith.constant 0 : index
    %c0_31 = arith.constant 0 : index
    %c0_32 = arith.constant 0 : index
    %86 = vector.load %arg4[%c0_30, %c0_31, %c0_32] : memref<1x8x128xf32, #tpu.memory_space<vmem>>, vector<1x8x128xf32>
    %87 = vector.shape_cast %86 : vector<1x8x128xf32> to vector<8x128xf32>
    %88 = vector.shape_cast %85 : vector<8x128xf32> to vector<1x8x128xf32>
    tpu.vector_store %arg4[%c0_30, %c0_31, %c0_32], %88 {strides = array<i32>} : memref<1x8x128xf32, #tpu.memory_space<vmem>>, vector<1x8x128xf32>,
    return
  }
  func.func @transform_0(%arg0: i32, %arg1: i32) -> (i32, i32, i32) {
    %c0_i32 = arith.constant 0 : i32
    %c0_i32_0 = arith.constant 0 : i32
    return %arg0, %c0_i32, %arg1 : i32, i32, i32
  }
  func.func @transform_1(%arg0: i32, %arg1: i32) -> (i32, i32, i32) {
    %c0_i32 = arith.constant 0 : i32
    %c0_i32_0 = arith.constant 0 : i32
    return %arg0, %c0_i32, %arg1 : i32, i32, i32
  }
  func.func @transform_2(%arg0: i32, %arg1: i32) -> (i32, i32, i32) {
    %c0_i32 = arith.constant 0 : i32
    %c0_i32_0 = arith.constant 0 : i32
    %c0_i32_1 = arith.constant 0 : i32
    return %arg0, %c0_i32, %c0_i32_0 : i32, i32, i32
  }
}

</mosaic_0001>

<llo_original>
// kernel: tpu_custom_call.1
$region0: #{tpu_custom_call.1}
  #allocation0 [shape = 'u32[]', space=smem, size = 0x4, offset = 0x4, fixed_abs, tag = 'smem constant byte address 0x4 - core index']
  #allocation1 [shape = 'u32[72,128]{1,0:T(1,128)}', space=vmem, size = 0x9000, scoped, tag = 'internal scratch']
  %s0 = inlined_call_operand.hbm [shape: f32[2,4,256], index: 0, kind: input, shape index: {}]
  %s1 = inlined_call_operand.hbm [shape: bf16[2,4,256], index: 1, kind: input, shape index: {}]
  %s2 = inlined_call_operand.hbm [shape: f32[2,8,128], index: 2, kind: output, shape index: {}]
  %s3 = sld [smem:[#allocation0]]
  $region53: #{tpu_custom_call.1} parent=0
    _
  %s5 = ssub.s32 1, %s3
  %s6 = scalar_select 0, %s5, %s3
  $region1: #{tpu_custom_call.1} parent=0
    #allocation2 [shape = 'u8[8192]{0}', space=vmem, size = 0x2000, scoped, tag = 'input window, operand 0']
    #allocation3 [shape = 's32[2]{0}', space=sflag, size = 0x8, scoped, tag = 'scoped memory for tpu_custom_call.1']
    #allocation4 [shape = 's32[2]{0}', space=sflag, size = 0x8, scoped, tag = 'scoped memory for tpu_custom_call.1']
    #allocation5 [shape = 'u8[4096]{0}', space=vmem, size = 0x1000, scoped, tag = 'input window, operand 1']
    #allocation6 [shape = 's32[2]{0}', space=sflag, size = 0x8, scoped, tag = 'scoped memory for tpu_custom_call.1']
    #allocation7 [shape = 'u8[8192]{0}', space=vmem, size = 0x2000, scoped, tag = 'output window, operand 0']
    %7 = vsyncpa [#allocation3], 0
    %s8 = scalar_lea.sflag [#allocation3], 1
    %9 = vsyncpa %s8, 0
    %10 = vsyncpa [#allocation6], 0
    %s11 = scalar_lea.sflag [#allocation6], 1
    %12 = vsyncpa %s11, 0
    %13 = vsyncpa [#allocation4], 0
    %s14 = scalar_lea.sflag [#allocation4], 1
    %15 = vsyncpa %s14, 0
    loop: start=0, step=1, limit=4
    $region2: #{tpu_custom_call.1} parent=1 // loop_pre_header
      _
    $region3: #{tpu_custom_call.1} parent=1 // loop_header
      %s17 = sphi 0, %s21
      %p18 = scmp.ge.s32.totalorder %s17, 4
      %s24 = sphi 0, %s36
      %s25 = sphi 0, %s32
      %s26 = sphi 0, %s24
      %s27 = sphi 0, %s25
      %s28 = sphi 0, %s26
      %s29 = sphi 0, %s27
      %s41 = sphi 0, %s43
      %s44 = sphi 0, %s41
      %s45 = sphi 0, %s44
      %s61 = sphi 0, %s45
      %s69 = sphi 0, %s71
      %s72 = sphi 0, %s69
      %s73 = sphi 0, %s72
      %s89 = sphi 0, %s73
      %s95 = sphi 0, %s97
      %s98 = sphi 0, %s95
      %s99 = sphi 0, %s98
      %s115 = sphi 0, %s99
    $region4: #{tpu_custom_call.1} parent=1 // loop_header_branch
      %20 = sbr.rel (%p18) target = $region8
    $region5: #{tpu_custom_call.1} parent=1 // loop_body
      %s22 = ssub.s32 %s17, 1
      %s23 = ssub.s32 %s17, 2
      %s30 = sadd.s32 1, %s25
      %p31 = scmp.ge.s32.totalorder %s30, 1
      %s32 = scalar_select %p31, 0, %s30
      %s33 = sadd.s32 1, %s24
      %s34 = scalar_select %p31, %s33, %s24
      %p35 = scmp.ge.s32.totalorder %s34, 2
      %s36 = scalar_select %p35, 0, %s34
      %s37 = ssub.s32 %s24, %s36
      %s38 = ssub.s32 %s25, %s32
      %s39 = sor.u32 %s37, %s38
      %p40 = scmp.eq.s32.totalorder %s39, 0
      %s42 = sadd.s32 %s41, 1
      %s43 = scalar_select %p40, %s41, %s42
      %p46 = pneg %p40
      %p47 = scmp.eq.s32.totalorder %s17, 1
      %p48 = por %p46, %p47
      %p49 = scmp.ne.s32.totalorder %s41, %s44
      %p50 = scmp.eq.s32.totalorder %s17, 0
      %p51 = por %p49, %p50
      %p52 = scmp.ne.s32.totalorder %s41, %s44
      %p53 = scmp.eq.s32.totalorder %s22, 1
      %p54 = por %p52, %p53
      %p55 = scmp.ne.s32.totalorder %s44, %s45
      %p56 = scmp.eq.s32.totalorder %s22, 0
      %p57 = por %p55, %p56
      %p58 = scmp.ne.s32.totalorder %s44, %s45
      %p59 = scmp.eq.s32.totalorder %s23, 1
      %p60 = por %p58, %p59
      %p62 = scmp.ne.s32.totalorder %s45, %s61
      %p63 = scmp.eq.s32.totalorder %s23, 0
      %p64 = por %p62, %p63
      %s65 = ssub.s32 %s24, %s36
      %s66 = ssub.s32 %s25, %s32
      %s67 = sor.u32 %s65, %s66
      %p68 = scmp.eq.s32.totalorder %s67, 0
      %s70 = sadd.s32 %s69, 1
      %s71 = scalar_select %p68, %s69, %s70
      %p74 = pneg %p68
      %p75 = scmp.eq.s32.totalorder %s17, 1
      %p76 = por %p74, %p75
      %p77 = scmp.ne.s32.totalorder %s69, %s72
      %p78 = scmp.eq.s32.totalorder %s17, 0
      %p79 = por %p77, %p78
      %p80 = scmp.ne.s32.totalorder %s69, %s72
      %p81 = scmp.eq.s32.totalorder %s22, 1
      %p82 = por %p80, %p81
      %p83 = scmp.ne.s32.totalorder %s72, %s73
      %p84 = scmp.eq.s32.totalorder %s22, 0
      %p85 = por %p83, %p84
      %p86 = scmp.ne.s32.totalorder %s72, %s73
      %p87 = scmp.eq.s32.totalorder %s23, 1
      %p88 = por %p86, %p87
      %p90 = scmp.ne.s32.totalorder %s73, %s89
      %p91 = scmp.eq.s32.totalorder %s23, 0
      %p92 = por %p90, %p91
      %s93 = ssub.s32 %s24, %s36
      %p94 = scmp.eq.s32.totalorder %s93, 0
      %s96 = sadd.s32 %s95, 1
      %s97 = scalar_select %p94, %s95, %s96
      %p100 = pneg %p94
      %p101 = scmp.eq.s32.totalorder %s17, 1
      %p102 = por %p100, %p101
      %p103 = scmp.ne.s32.totalorder %s95, %s98
      %p104 = scmp.eq.s32.totalorder %s17, 0
      %p105 = por %p103, %p104
      %p106 = scmp.ne.s32.totalorder %s95, %s98
      %p107 = scmp.eq.s32.totalorder %s22, 1
      %p108 = por %p106, %p107
      %p109 = scmp.ne.s32.totalorder %s98, %s99
      %p110 = scmp.eq.s32.totalorder %s22, 0
      %p111 = por %p109, %p110
      %p112 = scmp.ne.s32.totalorder %s98, %s99
      %p113 = scmp.eq.s32.totalorder %s23, 1
      %p114 = por %p112, %p113
      %p116 = scmp.ne.s32.totalorder %s99, %s115
      %p117 = scmp.eq.s32.totalorder %s23, 0
      %p118 = por %p116, %p117
      %p119 = scmp.le.s32.totalorder 1, %s17
      %p120 = scmp.lt.s32.totalorder %s17, 3
      %p121 = pnand %p119, %p120
      %p122 = pneg %p121
      // Predicated region
      $region9: #{tpu_custom_call.1} parent=5 // pred_check
        _
      $region10: #{tpu_custom_call.1} parent=5 // pred_check_branch
        %124 = sbr.rel (%p121) target = $region12
      $region11: #{tpu_custom_call.1} parent=5 // pred_region
        %s125 = ssub.s32 %s17, 1
      $region12: #{tpu_custom_call.1} parent=5 // pred_fallthru
        _
      %p126 = scmp.lt.s32.totalorder %s17, 2
      // Predicated region
      $region13: #{tpu_custom_call.1} parent=5 // pred_check
        %p127 = pneg %p126
      $region14: #{tpu_custom_call.1} parent=5 // pred_check_branch
        %129 = sbr.rel (%p127) target = $region16
      $region15: #{tpu_custom_call.1} parent=5 // pred_region
        // Predicated region
        $region17: #{tpu_custom_call.1} parent=15 // pred_check
          %p130 = pneg %p51
        $region18: #{tpu_custom_call.1} parent=15 // pred_check_branch
          %132 = sbr.rel (%p130) target = $region20
        $region19: #{tpu_custom_call.1} parent=15 // pred_region
          %s133 = sand.u32 %s41, 1
          %s134 = scalar_lea.sflag [#allocation3], %s133
          %s135 = sand.u32 %s41, 1
          %s136 = smul.addr %s135, 8
          %s137 = scalar_lea.vmem [#allocation2], %s136
          %s138 = smul.u32 2, %s25
          %140 = vsyncadd %s134, 0
          %s141 = smul.addr %s24, 2
          %s142 = sadd.s32 %s138, %s141
          %s143 = smul.addr %s142, 4
          %s144 = scalar_lea.hbm %s0, %s143
          %s146 = sshll.u32 %s144, 4
          %s147 = int_to_ptr.hbm [resolvable:$true] %s146
          %s148 = sshll.u32 %s137, 4
          %s149 = int_to_ptr.vmem [resolvable:$true] %s148
          %151 = dma.hbm_to_vmem [thread:$0]  %s147, 128, %s149, %s134
        $region20: #{tpu_custom_call.1} parent=15 // pred_fallthru
          _
        // Predicated region
        $region21: #{tpu_custom_call.1} parent=15 // pred_check
          %p152 = pneg %p79
        $region22: #{tpu_custom_call.1} parent=15 // pred_check_branch
          %154 = sbr.rel (%p152) target = $region24
        $region23: #{tpu_custom_call.1} parent=15 // pred_region
          %s155 = sand.u32 %s69, 1
          %s156 = scalar_lea.sflag [#allocation6], %s155
          %s157 = sand.u32 %s69, 1
          %s158 = smul.addr %s157, 4
          %s159 = scalar_lea.vmem [#allocation5], %s158
          %s160 = smul.u32 2, %s25
          %162 = vsyncadd %s156, 0
          %s163 = smul.addr %s24, 2
          %s164 = sadd.s32 %s160, %s163
          %s165 = smul.addr %s164, 2
          %s166 = scalar_lea.hbm %s1, %s165
          %s168 = sshll.u32 %s166, 4
          %s169 = int_to_ptr.hbm [resolvable:$true] %s168
          %s170 = sshll.u32 %s159, 4
          %s171 = int_to_ptr.vmem [resolvable:$true] %s170
          %173 = dma.hbm_to_vmem [thread:$0]  %s169, 64, %s171, %s156
        $region24: #{tpu_custom_call.1} parent=15 // pred_fallthru
          _
      $region16: #{tpu_custom_call.1} parent=5 // pred_fallthru
        _
      %p174 = scmp.le.s32.totalorder 1, %s17
      %p175 = scmp.lt.s32.totalorder %s17, 3
      %p176 = pnand %p174, %p175
      %p177 = pneg %p176
      // Predicated region
      $region25: #{tpu_custom_call.1} parent=5 // pred_check
        _
      $region26: #{tpu_custom_call.1} parent=5 // pred_check_branch
        %179 = sbr.rel (%p176) target = $region28
      $region27: #{tpu_custom_call.1} parent=5 // pred_region
        %s180 = ssub.s32 %s17, 1
        %s181 = sand.u32 %s44, 1
        %s182 = scalar_lea.sflag [#allocation3], %s181
        %s183 = sand.u32 %s44, 1
        %s184 = smul.addr %s183, 8
        %s185 = scalar_lea.vmem [#allocation2], %s184
        // Predicated region
        $region29: #{tpu_custom_call.1} parent=27 // pred_check
          %p186 = pneg %p57
        $region30: #{tpu_custom_call.1} parent=27 // pred_check_branch
          %188 = sbr.rel (%p186) target = $region32
        $region31: #{tpu_custom_call.1} parent=27 // pred_region
          %190 = dma.done %s182, 128
        $region32: #{tpu_custom_call.1} parent=27 // pred_fallthru
          _
        %s191 = sand.u32 %s72, 1
        %s192 = scalar_lea.sflag [#allocation6], %s191
        %s193 = sand.u32 %s72, 1
        %s194 = smul.addr %s193, 4
        %s195 = scalar_lea.vmem [#allocation5], %s194
        // Predicated region
        $region33: #{tpu_custom_call.1} parent=27 // pred_check
          %p196 = pneg %p85
        $region34: #{tpu_custom_call.1} parent=27 // pred_check_branch
          %198 = sbr.rel (%p196) target = $region36
        $region35: #{tpu_custom_call.1} parent=27 // pred_region
          %200 = dma.done %s192, 64
        $region36: #{tpu_custom_call.1} parent=27 // pred_fallthru
          _
        %s201 = sand.u32 %s44, 1
        %s202 = scalar_lea.sflag [#allocation3], %s201
        %s203 = sand.u32 %s44, 1
        %s204 = smul.addr %s203, 8
        %s205 = scalar_lea.vmem [#allocation2], %s204
        %p206 = pneg %p57
        %p207 = pneg %p54
        %s208 = sand.u32 %s72, 1
        %s209 = scalar_lea.sflag [#allocation6], %s208
        %s210 = sand.u32 %s72, 1
        %s211 = smul.addr %s210, 4
        %s212 = scalar_lea.vmem [#allocation5], %s211
        %p213 = pneg %p85
        %p214 = pneg %p82
        %p215 = pneg %p111
        %p216 = pneg %p108
        %s217 = sand.u32 %s98, 1
        %s218 = scalar_lea.sflag [#allocation4], %s217
        %s219 = sand.u32 %s98, 1
        %s220 = smul.addr %s219, 8
        %s221 = scalar_lea.vmem [#allocation7], %s220
        %s222 = smul.u32 2, %s27
        %s223 = smul.u32 2, %s27
        %p224 = scmp.eq.s32.totalorder %s27, 0
        // Predicated region
        $region37: #{tpu_custom_call.1} parent=27 // pred_check
          %p225 = pneg %p224
        $region38: #{tpu_custom_call.1} parent=27 // pred_check_branch
          %227 = sbr.rel (%p225) target = $region40
        $region39: #{tpu_custom_call.1} parent=27 // pred_region
          %228 = vst [vmem:[%s221] sm:$0xff] 0.0
        $region40: #{tpu_custom_call.1} parent=27 // pred_fallthru
          _
        %v229 = vld [vmem:[%s185] sm:$0xff]
        %v230 = vld [vmem:[%s195] sm:$0xf]
        %v231 = vunpack.c.l.bf16 %v230
        %233 = vst [vmem:[#allocation1] ss:$2 sm:$0xff] %v229
        %v234 = vld.sshfl [vmem:[#allocation1] sm:$0xff pattern:$0x75316420]
        %v235 = vld.sshfl [vmem:[#allocation1 + $0x8] sm:$0xff pattern:$0x75316420]
        %vm238 = vcmask 1043456
        %v239 = vsel %vm238, %v234, -inf
        %v240 = vrot.slane %v239, 4
        %v241 = vmax.f32 %v239, %v240
        %v242 = vrot.slane %v241, 2
        %v243 = vmax.f32 %v241, %v242
        %v244 = vrot.slane %v243, 1
        %v245 = vmax.f32 %v243, %v244
        %v246 = vsel %vm238, %v235, -inf
        %v247 = vrot.slane %v246, 4
        %v248 = vmax.f32 %v246, %v247
        %v249 = vrot.slane %v248, 2
        %v250 = vmax.f32 %v248, %v249
        %v251 = vrot.slane %v250, 1
        %v252 = vmax.f32 %v250, %v251
        %v255 = vrot.slane %v252, 4
        %v256 = vsel %vm238, %v245, %v255
        %v258 = vsub.f32 %v229, %v256
        %v259 = vmul.f32 %v258, 1.442695
        %v260 = vpow.pop %v259
        %262 = vst [vmem:[#allocation1] ss:$2 sm:$0xff] %v260
        %v263 = vld.sshfl [vmem:[#allocation1] sm:$0xff pattern:$0x75316420]
        %v264 = vld.sshfl [vmem:[#allocation1 + $0x8] sm:$0xff pattern:$0x75316420]
        %v267 = vsel %vm238, %v263, 0.0
        %v268 = vrot.slane %v267, 4
        %v269 = vadd.f32 %v267, %v268
        %v270 = vrot.slane %v269, 2
        %v271 = vadd.f32 %v269, %v270
        %v272 = vrot.slane %v271, 1
        %v273 = vadd.f32 %v271, %v272
        %v274 = vsel %vm238, %v264, 0.0
        %v275 = vrot.slane %v274, 4
        %v276 = vadd.f32 %v274, %v275
        %v277 = vrot.slane %v276, 2
        %v278 = vadd.f32 %v276, %v277
        %v279 = vrot.slane %v278, 1
        %v280 = vadd.f32 %v278, %v279
        %v281 = vrcp.pop %v273
        %v282 = vmul.f32 %v273, %v281
        %v283 = vsub.f32 1.0, %v282
        %v284 = vmul.f32 %v281, %v283
        %v285 = vadd.f32 %v281, %v284
        %vm286 = vweird.f32 %v273
        %vm287 = vweird.f32 %v281
        %vm288 = vmor %vm286, %vm287
        %v289 = vsel %vm288, %v281, %v285
        %v290 = vand.u32 2147483647, %v273
        %vm291 = vcmp.eq.f32.partialorder %v290, 8.507059e+37
        %v292 = vand.u32 %v273, 2147483648
        %v293 = vor.u32 1.1754944e-38, %v292
        %v294 = vsel %vm291, %v293, %v289
        %v295 = vrcp.pop %v280
        %v296 = vmul.f32 %v280, %v295
        %v297 = vsub.f32 1.0, %v296
        %v298 = vmul.f32 %v295, %v297
        %v299 = vadd.f32 %v295, %v298
        %vm300 = vweird.f32 %v280
        %vm301 = vweird.f32 %v295
        %vm302 = vmor %vm300, %vm301
        %v303 = vsel %vm302, %v295, %v299
        %v304 = vand.u32 2147483647, %v280
        %vm305 = vcmp.eq.f32.partialorder %v304, 8.507059e+37
        %v306 = vand.u32 %v280, 2147483648
        %v307 = vor.u32 1.1754944e-38, %v306
        %v308 = vsel %vm305, %v307, %v303
        %v311 = vrot.slane %v308, 4
        %v312 = vsel %vm238, %v294, %v311
        %v314 = vmul.f32 %v260, %v312
        %v315 = vmul.f32 %v314, %v231
        %317 = vst [vmem:[#allocation1] ss:$2 sm:$0xff] %v315
        %v318 = vld.sshfl [vmem:[#allocation1] sm:$0xff pattern:$0x75316420]
        %v319 = vld.sshfl [vmem:[#allocation1 + $0x8] sm:$0xff pattern:$0x75316420]
        %322 = vrot.lane.b32.xlu0 %v318, 127
        %v323 = vpop.permute.xlu0 %322
        %324 = vrot.lane.b32.xlu0 %v319, 127
        %v325 = vpop.permute.xlu0 %324
        %v326 = vlaneseq
        %v327 = vand.u32 %v326, 127
        %vm328 = vcmp.lt.s32.totalorder %v327, 127
        %v329 = vsel %vm328, %v323, %v325
        %v330 = vsel %vm328, %v325, %v323
        %v333 = vrot.slane %v330, 4
        %v334 = vsel %vm238, %v329, %v333
        %v336 = vadd.f32 %v315, %v334
        %338 = vst [vmem:[#allocation1] ss:$2 sm:$0xff] %v336
        %v339 = vld.sshfl [vmem:[#allocation1] sm:$0xff pattern:$0x75316420]
        %v340 = vld.sshfl [vmem:[#allocation1 + $0x8] sm:$0xff pattern:$0x75316420]
        %343 = vrot.lane.b32.xlu0 %v339, 126
        %v344 = vpop.permute.xlu0 %343
        %345 = vrot.lane.b32.xlu0 %v340, 126
        %v346 = vpop.permute.xlu0 %345
        %vm347 = vcmp.lt.s32.totalorder %v327, 126
        %v348 = vsel %vm347, %v344, %v346
        %v349 = vsel %vm347, %v346, %v344
        %v352 = vrot.slane %v349, 4
        %v353 = vsel %vm238, %v348, %v352
        %v355 = vadd.f32 %v336, %v353
        %v356 = vadd.f32 %v314, %v231
        %358 = vst [vmem:[#allocation1] ss:$2 sm:$0xff] %v356
        %v359 = vld.sshfl [vmem:[#allocation1] sm:$0xff pattern:$0x75316420]
        %v360 = vld.sshfl [vmem:[#allocation1 + $0x8] sm:$0xff pattern:$0x75316420]
        %363 = vrot.lane.b32.xlu0 %v359, 127
        %v364 = vpop.permute.xlu0 %363
        %365 = vrot.lane.b32.xlu0 %v360, 127
        %v366 = vpop.permute.xlu0 %365
        %v367 = vsel %vm328, %v364, %v366
        %v368 = vsel %vm328, %v366, %v364
        %v371 = vrot.slane %v368, 4
        %v372 = vsel %vm238, %v367, %v371
        %v374 = vadd.f32 %v356, %v372
        %376 = vst [vmem:[#allocation1] ss:$2 sm:$0xff] %v374
        %v377 = vld.sshfl [vmem:[#allocation1] sm:$0xff pattern:$0x75316420]
        %v378 = vld.sshfl [vmem:[#allocation1 + $0x8] sm:$0xff pattern:$0x75316420]
        %381 = vrot.lane.b32.xlu0 %v377, 126
        %v382 = vpop.permute.xlu0 %381
        %383 = vrot.lane.b32.xlu0 %v378, 126
        %v384 = vpop.permute.xlu0 %383
        %v385 = vsel %vm347, %v382, %v384
        %v386 = vsel %vm347, %v384, %v382
        %v389 = vrot.slane %v386, 4
        %v390 = vsel %vm238, %v385, %v389
        %v392 = vadd.f32 %v374, %v390
        %v393 = vmul.f32 %v355, 2.0
        %v394 = vadd.f32 %v393, 1.0
        %v395 = vadd.f32 %v392, 1.0
        %v396 = vrcp.pop %v395
        %v397 = vmul.f32 %v395, %v396
        %v398 = vsub.f32 1.0, %v397
        %v399 = vmul.f32 %v396, %v398
        %v400 = vadd.f32 %v396, %v399
        %vm401 = vweird.f32 %v395
        %vm402 = vweird.f32 %v396
        %vm403 = vmor %vm401, %vm402
        %v404 = vsel %vm403, %v396, %v400
        %v405 = vand.u32 2147483647, %v395
        %vm406 = vcmp.eq.f32.partialorder %v405, 8.507059e+37
        %v407 = vand.u32 %v395, 2147483648
        %v408 = vor.u32 1.1754944e-38, %v407
        %v409 = vsel %vm406, %v408, %v404
        %v410 = vmul.f32 %v394, %v409
        %v411 = vadd.s32 %v327, 128
        %v412 = vcvt.s32.f32 %v327
        %v413 = vcvt.s32.f32 %v411
        %414 = vrot.lane.b32.xlu0 %v412, 127
        %v415 = vpop.permute.xlu0 %414
        %416 = vrot.lane.b32.xlu0 %v413, 127
        %v417 = vpop.permute.xlu0 %416
        %v418 = vsel %vm328, %v415, %v417
        %v419 = vsel %vm328, %v417, %v415
        %vm420 = vcmp.eq.s32.totalorder %v327, 0
        %vm421 = vcmp.eq.s32.totalorder %v411, 0
        %v422 = vsel %vm420, %v418, 0.0
        %v423 = vsel %vm421, %v419, 0.0
        %vm424 = vcmask 1040384
        %v425 = vsel %vm424, %v422, 0.0
        %v426 = vsel %vm424, %v423, 0.0
        %v427 = vadd.f32 %v425, %v426
        %428 = vadd.xlane.f32.xlu0 %v427
        %v429 = vpop.xlane.xlu0 %428
        %v430 = vrot.slane %v429, 4
        %v431 = vadd.f32 %v429, %v430
        %v432 = vrot.slane %v431, 2
        %v433 = vadd.f32 %v431, %v432
        %v434 = vrot.slane %v433, 1
        %v435 = vadd.f32 %v433, %v434
        %s436 = vtos %v435
        %p437 = scmp.lt.f32.partialorder %s436, 1.5
        %s438 = scalar_select %p437, 0, 3
        %vm439 = vcmp.lt.s32.totalorder %v327, 0
        %v440 = vsub.s32 0, %v327
        %v441 = vsel %vm439, %v440, %v327
        %v442 = vshrl.u32 %v441, 2
        %v443 = vand.u32 %v441, 3
        %v444 = vsub.s32 0, %v443
        %v445 = vsel %vm439, %v444, %v443
        %vm446 = vcmp.lt.s32.totalorder %v411, 0
        %v447 = vsub.s32 0, %v411
        %v448 = vsel %vm446, %v447, %v411
        %v449 = vshrl.u32 %v448, 2
        %v450 = vand.u32 %v448, 3
        %v451 = vsub.s32 0, %v450
        %v452 = vsel %vm446, %v451, %v450
        %vm453 = vcmp.ne.s32.totalorder %v445, 0
        %vm454 = vcmp.ne.s32.totalorder %v452, 0
        %vm455 = vcmp.lt.s32.totalorder %v445, 0
        %vm456 = vcmp.lt.s32.totalorder %v452, 0
        %vm457 = vmand %vm455, %vm453
        %vm458 = vmand %vm456, %vm454
        %v459 = vadd.s32 %v445, 4
        %v460 = vadd.s32 %v452, 4
        %v461 = vsel %vm457, %v459, %v445
        %v462 = vsel %vm458, %v460, %v452
        %v463 = vstv %s438
        %vm464 = vcmp.eq.s32.totalorder %v461, %v463
        %vm465 = vcmp.eq.s32.totalorder %v462, %v463
        %467 = vst [vmem:[#allocation1] ss:$2 sm:$0xff] %v410
        %v468 = vld.sshfl [vmem:[#allocation1] sm:$0xff pattern:$0x75316420]
        %v469 = vld.sshfl [vmem:[#allocation1 + $0x8] sm:$0xff pattern:$0x75316420]
        %v472 = vsel %vm464, %v468, 0.0
        %v473 = vsel %vm465, %v469, 0.0
        %v474 = vsel %vm238, %v472, 0.0
        %v475 = vsel %vm238, %v473, 0.0
        %v476 = vadd.f32 %v474, %v475
        %477 = vadd.xlane.f32.xlu0 %v476
        %v478 = vpop.xlane.xlu0 %477
        %v479 = vrot.slane %v478, 4
        %v480 = vadd.f32 %v478, %v479
        %v481 = vrot.slane %v480, 2
        %v482 = vadd.f32 %v480, %v481
        %v483 = vrot.slane %v482, 1
        %v484 = vadd.f32 %v482, %v483
        %s485 = vtos %v484
        %v486 = vlaneseq
        %v487 = vshrl.u32 %v486, 7
        %v488 = vld [vmem:[%s221] sm:$0xff]
        %vm489 = vcmp.eq.s32.totalorder %v487, 0
        %vm490 = vmand %vm489, %vm420
        %v491 = vstv %s485
        %v492 = vsel %vm490, %v491, 0.0
        %v493 = vadd.f32 %v488, %v492
        %494 = vst [vmem:[%s221] sm:$0xff] %v493
        %s495 = sand.u32 %s98, 1
        %s496 = scalar_lea.sflag [#allocation4], %s495
        %s497 = sand.u32 %s98, 1
        %s498 = smul.addr %s497, 8
        %s499 = scalar_lea.vmem [#allocation7], %s498
        // Predicated region
        $region41: #{tpu_custom_call.1} parent=27 // pred_check
          %p500 = pneg %p108
        $region42: #{tpu_custom_call.1} parent=27 // pred_check_branch
          %502 = sbr.rel (%p500) target = $region44
        $region43: #{tpu_custom_call.1} parent=27 // pred_region
          %504 = vsyncadd %s496, 0
          %s505 = smul.addr %s26, 8
          %s506 = scalar_lea.hbm %s2, %s505
          %s508 = sshll.u32 %s499, 4
          %s509 = int_to_ptr.vmem [resolvable:$true] %s508
          %s510 = sshll.u32 %s506, 4
          %s511 = int_to_ptr.hbm [resolvable:$true] %s510
          %513 = dma.vmem_to_hbm [thread:$0]  %s509, 128, %s511, %s496
        $region44: #{tpu_custom_call.1} parent=27 // pred_fallthru
          _
      $region28: #{tpu_custom_call.1} parent=5 // pred_fallthru
        _
      %p514 = scmp.le.s32.totalorder 2, %s17
      // Predicated region
      $region45: #{tpu_custom_call.1} parent=5 // pred_check
        %p515 = pneg %p514
      $region46: #{tpu_custom_call.1} parent=5 // pred_check_branch
        %517 = sbr.rel (%p515) target = $region48
      $region47: #{tpu_custom_call.1} parent=5 // pred_region
        %s518 = ssub.s32 %s17, 2
        // Predicated region
        $region49: #{tpu_custom_call.1} parent=47 // pred_check
          %p519 = pneg %p114
        $region50: #{tpu_custom_call.1} parent=47 // pred_check_branch
          %521 = sbr.rel (%p519) target = $region52
        $region51: #{tpu_custom_call.1} parent=47 // pred_region
          %s522 = sand.u32 %s99, 1
          %s523 = scalar_lea.sflag [#allocation4], %s522
          %s524 = sand.u32 %s99, 1
          %s525 = smul.addr %s524, 8
          %s526 = scalar_lea.vmem [#allocation7], %s525
          %528 = dma.done %s523, 128
        $region52: #{tpu_custom_call.1} parent=47 // pred_fallthru
          _
      $region48: #{tpu_custom_call.1} parent=5 // pred_fallthru
        _
    $region6: #{tpu_custom_call.1} parent=1 // loop_footer
      %s21 = sadd.s32 1, %s17
    $region7: #{tpu_custom_call.1} parent=1 // loop_footer_branch
      %16 = sbr.rel target = $region3
    $region8: #{tpu_custom_call.1} parent=1 // loop_exit
      _
    %529 = vsyncpa [#allocation3], 1
    %s530 = scalar_lea.sflag [#allocation3], 1
    %531 = vsyncpa %s530, 1
    %532 = vsyncpa [#allocation6], 1
    %s533 = scalar_lea.sflag [#allocation6], 1
    %534 = vsyncpa %s533, 1
    %535 = vsyncpa [#allocation4], 1
    %s536 = scalar_lea.sflag [#allocation4], 1
    %537 = vsyncpa %s536, 1

</llo_original>
